<compile_context>
chip_gen: v6e
topology: v6e:2x2x1
jax: 0.10.0
libtpu: 0.0.40
codegen_flags: <defaults>
</compile_context>

<pallas_src>
import jax
import jax.numpy as jnp
from jax.experimental import pallas as pl
from jax.experimental.pallas import tpu as pltpu


# ----------------------------------------------------------------------------- kernel
def audio_nn_kernel(x_ref, w1_ref, b1_ref, w2_ref, b2_ref, w3_ref, b3_ref, o_ref):
    # hidden_layer[0]: Linear(input_size, 128) + ReLU  (f32 MXU: K=32 is one pass,
    # keeps full input precision and avoids a per-call input cast in the wrapper)
    h1 = jnp.dot(x_ref[...], w1_ref[...], preferred_element_type=jnp.float32)
    h1 = jnp.maximum(h1 + b1_ref[...], 0.0)
    # Dropout(0.3): identity at inference
    # TODO(synk): training-mode dropout would need pltpu.prng_seed/prng_random_bits masking
    h1 = h1.astype(jnp.bfloat16)  # bf16 operand for the next MXU op

    # hidden_layer[3]: Linear(128, 256) + ReLU  (bf16 MXU, f32 accumulate)
    h2 = jnp.dot(h1, w2_ref[...], preferred_element_type=jnp.float32)
    h2 = jnp.maximum(h2 + b2_ref[...], 0.0)
    h2 = h2.astype(jnp.bfloat16)

    # output_layer: Linear(256, output_size)  (columns zero-padded to a lane-dense 128)
    out = jnp.dot(h2, w3_ref[...], preferred_element_type=jnp.float32) + b3_ref[...]
    o_ref[...] = out.astype(o_ref.dtype)


# ----------------------------------------------------------------------- helpers
def _num_tensorcores():
    """2 on dual-TensorCore chips (v7x), else 1. Safe fallback to 1."""
    try:
        kind = jax.devices()[0].device_kind.lower()
        if "v7" in kind or "7x" in kind:
            return 2
    except Exception:
        pass
    return 1


def _round16(n):
    return max(16, ((n + 15) // 16) * 16)


def _resident_spec(shape):
    """BlockSpec for weights/biases: identical block every grid step -> single-buffer
    when the installed Pallas supports pipeline_mode (double-buffering them only
    doubles VMEM footprint and DMA bookkeeping)."""
    index_map = lambda i: (0, 0)
    if hasattr(pl, "Buffered"):
        try:
            return pl.BlockSpec(shape, index_map, pipeline_mode=pl.Buffered(1))
        except TypeError:
            pass
    return pl.BlockSpec(shape, index_map)


# -------------------------------------------------------------- one-time param prep
def init_params(key, input_size, output_size):
    """Deterministic init mimicking nn.Linear's U(-1/sqrt(fan_in), 1/sqrt(fan_in)).
    Weights stored as [in, out] (transposed vs. PyTorch); biases as [1, out]."""
    def linear(k, fan_in, fan_out):
        kw, kb = jax.random.split(k)
        bound = 1.0 / jnp.sqrt(fan_in)
        w = jax.random.uniform(kw, (fan_in, fan_out), jnp.float32, -bound, bound)
        b = jax.random.uniform(kb, (1, fan_out), jnp.float32, -bound, bound)
        return w, b

    k1, k2, k3 = jax.random.split(key, 3)
    w1, b1 = linear(k1, input_size, 128)
    w2, b2 = linear(k2, 128, 256)
    w3, b3 = linear(k3, 256, output_size)
    return {"w1": w1, "b1": b1, "w2": w2, "b2": b2, "w3": w3, "b3": b3}


def prepare_params(params):
    """Build the device-ready parameter dict ONCE (hoisted out of the per-call path):
    w2/w3 cast to bf16, w3/b3 zero-padded to a lane-dense multiple of 128 columns."""
    w3, b3 = params["w3"], params["b3"]
    O = w3.shape[1]
    O_pad = max(128, pl.cdiv(O, 128) * 128)
    if O_pad != O:
        w3 = jnp.pad(w3, ((0, 0), (0, O_pad - O)))
        b3 = jnp.pad(b3, ((0, 0), (0, O_pad - O)))
    return {
        "w1": params["w1"],                       # layer 1 stays f32 (K=32, one MXU pass)
        "b1": params["b1"],
        "w2": params["w2"].astype(jnp.bfloat16),  # bf16 MXU operands, prepped once
        "b2": params["b2"],
        "w3": w3.astype(jnp.bfloat16),
        "b3": b3,                                 # f32 bias, added to f32 accumulator
        "out_features": O,                        # true (unpadded) output column count
    }


# -------------------------------------------------------------------------- forward
def audio_nn_forward(x, prepared, *, max_tile=512, out_dtype=jnp.float32):
    """x: [B, input_size] float32. prepared: dict from prepare_params()."""
    w1, b1 = prepared["w1"], prepared["b1"]
    w2, b2 = prepared["w2"], prepared["b2"]
    w3, b3 = prepared["w3"], prepared["b3"]
    O = prepared["out_features"]

    B, F = x.shape
    H1 = w1.shape[1]       # 128
    H2 = w2.shape[1]       # 256
    O_pad = w3.shape[1]    # lane-dense padded output columns (>=128)

    # ---- batch tiling: 1 step on single-TC chips when it fits; even >=2 steps on v7x
    n_tc = _num_tensorcores()
    if n_tc >= 2:
        tile_b = min(max_tile, _round16(pl.cdiv(B, 2)))
        B_pad = pl.cdiv(B, 2 * tile_b) * 2 * tile_b      # even number of grid steps
    else:
        tile_b = min(max_tile, _round16(B))
        B_pad = pl.cdiv(B, tile_b) * tile_b
    if B_pad != B:
        x = jnp.pad(x, ((0, B_pad - B), (0, 0)))         # padded rows sliced off below

    grid = (B_pad // tile_b,)

    flops = 2 * B_pad * (F * H1 + H1 * H2 + H2 * O_pad)
    bytes_accessed = (
        x.size * 4                                   # f32 input
        + w1.size * 4 + b1.size * 4                  # f32 first layer
        + w2.size * 2 + w3.size * 2                  # bf16 weights
        + b2.size * 4 + b3.size * 4
        + B_pad * O_pad * jnp.dtype(out_dtype).itemsize
    )

    out = pl.pallas_call(
        audio_nn_kernel,
        out_shape=jax.ShapeDtypeStruct((B_pad, O_pad), out_dtype),
        grid_spec=pltpu.PrefetchScalarGridSpec(
            num_scalar_prefetch=0,
            grid=grid,
            in_specs=[
                # x tiled over the batch axis
                pl.BlockSpec((tile_b, F), lambda i: (i, 0)),
                # weights / biases: full arrays, same block every grid step
                _resident_spec((F, H1)),
                _resident_spec((1, H1)),
                _resident_spec((H1, H2)),
                _resident_spec((1, H2)),
                _resident_spec((H2, O_pad)),
                _resident_spec((1, O_pad)),
            ],
            out_specs=pl.BlockSpec((tile_b, O_pad), lambda i: (i, 0)),
        ),
        compiler_params=pltpu.CompilerParams(
            dimension_semantics=("parallel",),
        ),
        cost_estimate=pl.CostEstimate(
            flops=flops, transcendentals=0, bytes_accessed=bytes_accessed
        ),
    )(x, w1, b1, w2, b2, w3, b3)

    # strip batch / output-column padding (cheap; padded cols never left VMEM as real data)
    return out[:B, :O]


def reference_forward(x, p):
    h1 = jnp.maximum(x @ p["w1"] + p["b1"], 0.0)
    h2 = jnp.maximum(h1 @ p["w2"] + p["b2"], 0.0)
    return h2 @ p["w3"] + p["b3"]


if __name__ == "__main__":
    INPUT_SIZE = 32      # e.g. number of MFCC features
    OUTPUT_SIZE = 16     # number of classes
    BATCH = 64           # small demo batch; 1 step on v5e/v6e, 2 even steps on v7x

    key = jax.random.PRNGKey(0)
    kx, kp = jax.random.split(key)
    x = jax.random.normal(kx, (BATCH, INPUT_SIZE), jnp.float32)

    raw_params = init_params(kp, INPUT_SIZE, OUTPUT_SIZE)
    params = prepare_params(raw_params)      # one-time, hoisted out of the hot path

    out = jax.block_until_ready(audio_nn_forward(x, params))
    ref = reference_forward(x, raw_params)
    assert out.shape == (BATCH, OUTPUT_SIZE)
    # bf16 MXU operands in layers 2/3 (f32 accumulation) -> looser tolerance vs f32 ref
    assert jnp.allclose(out, ref, atol=5e-2, rtol=5e-2), "mismatch vs JAX reference"

    # ragged / small batch path (tile clamp + batch padding)
    x_small = jax.random.normal(jax.random.PRNGKey(1), (20, INPUT_SIZE), jnp.float32)
    out_small = jax.block_until_ready(audio_nn_forward(x_small, params))
    ref_small = reference_forward(x_small, raw_params)
    assert out_small.shape == (20, OUTPUT_SIZE)
    assert jnp.allclose(out_small, ref_small, atol=5e-2, rtol=5e-2), "small-batch mismatch"

    print("KERNEL_OK")
</pallas_src>

<mosaic_0001>
module attributes {stable_mosaic.version = 11 : i64} {
  func.func @audio_nn_kernel(%arg0: i32, %arg1: memref<64x32xf32, #tpu.memory_space<vmem>>, %arg2: memref<32x128xf32, #tpu.memory_space<vmem>>, %arg3: memref<1x128xf32, #tpu.memory_space<vmem>>, %arg4: memref<128x256xbf16, #tpu.memory_space<vmem>>, %arg5: memref<1x256xf32, #tpu.memory_space<vmem>>, %arg6: memref<256x128xbf16, #tpu.memory_space<vmem>>, %arg7: memref<1x128xf32, #tpu.memory_space<vmem>>, %arg8: memref<64x128xf32, #tpu.memory_space<vmem>>) attributes {dimension_semantics = [#tpu.dimension_semantics<parallel>], iteration_bounds = array<i64: 1>, scalar_prefetch = 0 : i64, scratch_operands = 0 : i64, tpu.core_type = #tpu.core_type<tc>, window_params = [{transform_indices = @transform_0, window_bounds = array<i64: 64, 32>}, {pipeline_mode = #tpu.pipeline_mode<synchronous>, transform_indices = @transform_1, window_bounds = array<i64: 32, 128>}, {pipeline_mode = #tpu.pipeline_mode<synchronous>, transform_indices = @transform_2, window_bounds = array<i64: 1, 128>}, {pipeline_mode = #tpu.pipeline_mode<synchronous>, transform_indices = @transform_3, window_bounds = array<i64: 128, 256>}, {pipeline_mode = #tpu.pipeline_mode<synchronous>, transform_indices = @transform_4, window_bounds = array<i64: 1, 256>}, {pipeline_mode = #tpu.pipeline_mode<synchronous>, transform_indices = @transform_5, window_bounds = array<i64: 256, 128>}, {pipeline_mode = #tpu.pipeline_mode<synchronous>, transform_indices = @transform_6, window_bounds = array<i64: 1, 128>}, {transform_indices = @transform_7, window_bounds = array<i64: 64, 128>}]} {
    %c0 = arith.constant 0 : index
    %c0_0 = arith.constant 0 : index
    %0 = vector.load %arg1[%c0, %c0_0] : memref<64x32xf32, #tpu.memory_space<vmem>>, vector<64x32xf32>
    %c0_1 = arith.constant 0 : index
    %c0_2 = arith.constant 0 : index
    %1 = vector.load %arg2[%c0_1, %c0_2] : memref<32x128xf32, #tpu.memory_space<vmem>>, vector<32x128xf32>
    %cst = arith.constant dense<0.000000e+00> : vector<64x128xf32>
    %2 = tpu.matmul %0, %1, %cst {dimension_numbers = #tpu.dot_dimension_numbers<[1], [0], [0], [1], [0, 0, 1, 1], [], []>} : vector<64x32xf32>, vector<32x128xf32>, vector<64x128xf32> -> vector<64x128xf32>
    %c0_3 = arith.constant 0 : index
    %c0_4 = arith.constant 0 : index
    %3 = vector.load %arg3[%c0_3, %c0_4] : memref<1x128xf32, #tpu.memory_space<vmem>>, vector<1x128xf32>
    %4 = vector.broadcast %3 : vector<1x128xf32> to vector<64x128xf32>
    %5 = arith.addf %2, %4 : vector<64x128xf32>
    %cst_5 = arith.constant 0.000000e+00 : f32
    %6 = vector.broadcast %cst_5 : f32 to vector<64x128xf32>
    %7 = arith.maximumf %5, %6 : vector<64x128xf32>
    %8 = arith.truncf %7 : vector<64x128xf32> to vector<64x128xbf16>
    %c0_6 = arith.constant 0 : index
    %c0_7 = arith.constant 0 : index
    %9 = vector.load %arg4[%c0_6, %c0_7] : memref<128x256xbf16, #tpu.memory_space<vmem>>, vector<128x256xbf16>
    %cst_8 = arith.constant dense<0.000000e+00> : vector<64x256xf32>
    %10 = tpu.matmul %8, %9, %cst_8 {dimension_numbers = #tpu.dot_dimension_numbers<[1], [0], [0], [1], [0, 0, 1, 1], [], []>} : vector<64x128xbf16>, vector<128x256xbf16>, vector<64x256xf32> -> vector<64x256xf32>
    %c0_9 = arith.constant 0 : index
    %c0_10 = arith.constant 0 : index
    %11 = vector.load %arg5[%c0_9, %c0_10] : memref<1x256xf32, #tpu.memory_space<vmem>>, vector<1x256xf32>
    %12 = vector.broadcast %11 : vector<1x256xf32> to vector<64x256xf32>
    %13 = arith.addf %10, %12 : vector<64x256xf32>
    %cst_11 = arith.constant 0.000000e+00 : f32
    %14 = vector.broadcast %cst_11 : f32 to vector<64x256xf32>
    %15 = arith.maximumf %13, %14 : vector<64x256xf32>
    %16 = arith.truncf %15 : vector<64x256xf32> to vector<64x256xbf16>
    %c0_12 = arith.constant 0 : index
    %c0_13 = arith.constant 0 : index
    %17 = vector.load %arg6[%c0_12, %c0_13] : memref<256x128xbf16, #tpu.memory_space<vmem>>, vector<256x128xbf16>
    %cst_14 = arith.constant dense<0.000000e+00> : vector<64x128xf32>
    %18 = tpu.matmul %16, %17, %cst_14 {dimension_numbers = #tpu.dot_dimension_numbers<[1], [0], [0], [1], [0, 0, 1, 1], [], []>} : vector<64x256xbf16>, vector<256x128xbf16>, vector<64x128xf32> -> vector<64x128xf32>
    %c0_15 = arith.constant 0 : index
    %c0_16 = arith.constant 0 : index
    %19 = vector.load %arg7[%c0_15, %c0_16] : memref<1x128xf32, #tpu.memory_space<vmem>>, vector<1x128xf32>
    %20 = vector.broadcast %19 : vector<1x128xf32> to vector<64x128xf32>
    %21 = arith.addf %18, %20 : vector<64x128xf32>
    %c0_17 = arith.constant 0 : index
    %c0_18 = arith.constant 0 : index
    %22 = vector.load %arg8[%c0_17, %c0_18] : memref<64x128xf32, #tpu.memory_space<vmem>>, vector<64x128xf32>
    tpu.vector_store %arg8[%c0_17, %c0_18], %21 {strides = array<i32>} : memref<64x128xf32, #tpu.memory_space<vmem>>, vector<64x128xf32>,
    return
  }
  func.func @transform_0(%arg0: i32) -> (i32, i32) {
    %c0_i32 = arith.constant 0 : i32
    %c0_i32_0 = arith.constant 0 : i32
    return %arg0, %c0_i32 : i32, i32
  }
  func.func @transform_1(%arg0: i32) -> (i32, i32) {
    %c0_i32 = arith.constant 0 : i32
    %c0_i32_0 = arith.constant 0 : i32
    %c0_i32_1 = arith.constant 0 : i32
    return %c0_i32, %c0_i32_0 : i32, i32
  }
  func.func @transform_2(%arg0: i32) -> (i32, i32) {
    %c0_i32 = arith.constant 0 : i32
    %c0_i32_0 = arith.constant 0 : i32
    %c0_i32_1 = arith.constant 0 : i32
    return %c0_i32, %c0_i32_0 : i32, i32
  }
  func.func @transform_3(%arg0: i32) -> (i32, i32) {
    %c0_i32 = arith.constant 0 : i32
    %c0_i32_0 = arith.constant 0 : i32
    %c0_i32_1 = arith.constant 0 : i32
    return %c0_i32, %c0_i32_0 : i32, i32
  }
  func.func @transform_4(%arg0: i32) -> (i32, i32) {
    %c0_i32 = arith.constant 0 : i32
    %c0_i32_0 = arith.constant 0 : i32
    %c0_i32_1 = arith.constant 0 : i32
    return %c0_i32, %c0_i32_0 : i32, i32
  }
  func.func @transform_5(%arg0: i32) -> (i32, i32) {
    %c0_i32 = arith.constant 0 : i32
    %c0_i32_0 = arith.constant 0 : i32
    %c0_i32_1 = arith.constant 0 : i32
    return %c0_i32, %c0_i32_0 : i32, i32
  }
  func.func @transform_6(%arg0: i32) -> (i32, i32) {
    %c0_i32 = arith.constant 0 : i32
    %c0_i32_0 = arith.constant 0 : i32
    %c0_i32_1 = arith.constant 0 : i32
    return %c0_i32, %c0_i32_0 : i32, i32
  }
  func.func @transform_7(%arg0: i32) -> (i32, i32) {
    %c0_i32 = arith.constant 0 : i32
    %c0_i32_0 = arith.constant 0 : i32
    return %arg0, %c0_i32 : i32, i32
  }
}

</mosaic_0001>

<llo_original>
// kernel: tpu_custom_call.1
$region0: #{tpu_custom_call.1}
  #allocation0 [shape = 'u32[]', space=smem, size = 0x4, offset = 0x4, fixed_abs, tag = 'smem constant byte address 0x4 - core index']
  #allocation1 [shape = 'u32[144,128]{1,0:T(1,128)}', space=vmem, size = 0x12000, scoped, tag = 'internal scratch']
  %s0 = inlined_call_operand.vmem [shape: f32[64,32], index: 0, kind: input, shape index: {}]
  %s1 = inlined_call_operand.vmem [shape: f32[32,128], index: 1, kind: input, shape index: {}]
  %s2 = inlined_call_operand.vmem [shape: f32[1,128], index: 2, kind: input, shape index: {}]
  %s3 = inlined_call_operand.hbm [shape: bf16[128,256], index: 3, kind: input, shape index: {}]
  %s4 = inlined_call_operand.vmem [shape: f32[1,256], index: 4, kind: input, shape index: {}]
  %s5 = inlined_call_operand.hbm [shape: bf16[256,128], index: 5, kind: input, shape index: {}]
  %s6 = inlined_call_operand.vmem [shape: f32[1,128], index: 6, kind: input, shape index: {}]
  %s7 = inlined_call_operand.hbm [shape: f32[64,128], index: 7, kind: output, shape index: {}]
  %s8 = sld [smem:[#allocation0]]
  $region46: #{tpu_custom_call.1} parent=0
    _
  %s10 = ssub.s32 1, %s8
  %s11 = scalar_select 0, %s10, %s8
  $region1: #{tpu_custom_call.1} parent=0
    #allocation2 [shape = 'u8[65536]{0}', space=vmem, size = 0x10000, scoped, tag = 'input window, operand 3, single buffered']
    #allocation3 [shape = 's32[1]{0}', space=sflag, size = 0x4, scoped, tag = 'scoped memory for tpu_custom_call.1']
    #allocation4 [shape = 's32[1]{0}', space=sflag, size = 0x4, scoped, tag = 'scoped memory for tpu_custom_call.1']
    #allocation5 [shape = 'u8[65536]{0}', space=vmem, size = 0x10000, scoped, tag = 'input window, operand 5, single buffered']
    #allocation6 [shape = 's32[1]{0}', space=sflag, size = 0x4, scoped, tag = 'scoped memory for tpu_custom_call.1']
    #allocation7 [shape = 'u8[32768]{0}', space=vmem, size = 0x8000, scoped, tag = 'output window, operand 0, single buffered']
    %12 = vsyncpa [#allocation3], 0
    %13 = vsyncpa [#allocation6], 0
    %14 = vsyncpa [#allocation4], 0
    // Predicated region
    $region2: #{tpu_custom_call.1} parent=1 // pred_check
      _
    $region3: #{tpu_custom_call.1} parent=1 // pred_check_branch
      %16 = sbr.rel (0) target = $region5
    $region4: #{tpu_custom_call.1} parent=1 // pred_region
      _
    $region5: #{tpu_custom_call.1} parent=1 // pred_fallthru
      _
    // Predicated region
    $region6: #{tpu_custom_call.1} parent=1 // pred_check
      _
    $region7: #{tpu_custom_call.1} parent=1 // pred_check_branch
      %18 = sbr.rel (0) target = $region9
    $region8: #{tpu_custom_call.1} parent=1 // pred_region
      _
    $region9: #{tpu_custom_call.1} parent=1 // pred_fallthru
      _
    // Predicated region
    $region10: #{tpu_custom_call.1} parent=1 // pred_check
      _
    $region11: #{tpu_custom_call.1} parent=1 // pred_check_branch
      %20 = sbr.rel (0) target = $region13
    $region12: #{tpu_custom_call.1} parent=1 // pred_region
      _
    $region13: #{tpu_custom_call.1} parent=1 // pred_fallthru
      _
    // Predicated region
    $region14: #{tpu_custom_call.1} parent=1 // pred_check
      _
    $region15: #{tpu_custom_call.1} parent=1 // pred_check_branch
      %22 = sbr.rel (0) target = $region17
    $region16: #{tpu_custom_call.1} parent=1 // pred_region
      %s24 = ssub.s32 2048, 2048
      %25 = vsyncadd [#allocation3], %s24
      %s26 = sshll.u32 [#allocation2], 4
      %s27 = int_to_ptr.vmem [resolvable:$true] %s26
      %32 = dma.hbm_to_vmem [thread:$0]  %s3, 2048, %s27, [#allocation3], 128, 128, 8
    $region17: #{tpu_custom_call.1} parent=1 // pred_fallthru
      _
    // Predicated region
    $region18: #{tpu_custom_call.1} parent=1 // pred_check
      _
    $region19: #{tpu_custom_call.1} parent=1 // pred_check_branch
      %34 = sbr.rel (0) target = $region21
    $region20: #{tpu_custom_call.1} parent=1 // pred_region
      _
    $region21: #{tpu_custom_call.1} parent=1 // pred_fallthru
      _
    // Predicated region
    $region22: #{tpu_custom_call.1} parent=1 // pred_check
      _
    $region23: #{tpu_custom_call.1} parent=1 // pred_check_branch
      %36 = sbr.rel (0) target = $region25
    $region24: #{tpu_custom_call.1} parent=1 // pred_region
      %s38 = ssub.s32 2048, 2048
      %39 = vsyncadd [#allocation6], %s38
      %s40 = sshll.u32 [#allocation5], 4
      %s41 = int_to_ptr.vmem [resolvable:$true] %s40
      %46 = dma.hbm_to_vmem [thread:$0]  %s5, 2048, %s41, [#allocation6], 64, 64, 4
    $region25: #{tpu_custom_call.1} parent=1 // pred_fallthru
      _
    // Predicated region
    $region26: #{tpu_custom_call.1} parent=1 // pred_check
      _
    $region27: #{tpu_custom_call.1} parent=1 // pred_check_branch
      %48 = sbr.rel (0) target = $region29
    $region28: #{tpu_custom_call.1} parent=1 // pred_region
      _
    $region29: #{tpu_custom_call.1} parent=1 // pred_fallthru
      _
    // Predicated region
    $region30: #{tpu_custom_call.1} parent=1 // pred_check
      _
    $region31: #{tpu_custom_call.1} parent=1 // pred_check_branch
      %50 = sbr.rel (0) target = $region33
    $region32: #{tpu_custom_call.1} parent=1 // pred_region
      %51 = dma.done [#allocation3], 2048
    $region33: #{tpu_custom_call.1} parent=1 // pred_fallthru
      _
    // Predicated region
    $region34: #{tpu_custom_call.1} parent=1 // pred_check
      _
    $region35: #{tpu_custom_call.1} parent=1 // pred_check_branch
      %53 = sbr.rel (0) target = $region37
    $region36: #{tpu_custom_call.1} parent=1 // pred_region
      %54 = dma.done [#allocation6], 2048
    $region37: #{tpu_custom_call.1} parent=1 // pred_fallthru
      _
    %v56 = vld [vmem:[%s0] sm:$0xff]
    %v57 = vld [vmem:[%s0 + $0x8] sm:$0xff]
    %v58 = vld [vmem:[%s0 + $0x10] sm:$0xff]
    %v59 = vld [vmem:[%s0 + $0x18] sm:$0xff]
    %v60 = vld [vmem:[%s0 + $0x20] sm:$0xff]
    %v61 = vld [vmem:[%s0 + $0x28] sm:$0xff]
    %v62 = vld [vmem:[%s0 + $0x30] sm:$0xff]
    %v63 = vld [vmem:[%s0 + $0x38] sm:$0xff]
    %v64 = vld [vmem:[%s1] sm:$0xff]
    %v65 = vld [vmem:[%s1 + $0x8] sm:$0xff]
    %v66 = vld [vmem:[%s1 + $0x10] sm:$0xff]
    %v67 = vld [vmem:[%s1 + $0x18] sm:$0xff]
    %v68 = vld [vmem:[%s2] sm:$0x1]
    %v70 = vlaneseq
    %v71 = vshrl.u32 %v70, 7
    %v72 = vsub.s32 0, %v71
    %v73 = vrot.slane %v68, %v72
    %vm75 = vcmask 261120
    %v77 = vsel %vm75, %v56, 0
    %v80 = vsel %vm75, %v57, 0
    %v83 = vsel %vm75, %v58, 0
    %v86 = vsel %vm75, %v59, 0
    %v89 = vsel %vm75, %v60, 0
    %v92 = vsel %vm75, %v61, 0
    %v95 = vsel %vm75, %v62, 0
    %v98 = vsel %vm75, %v63, 0
    %100 = vmatprep.subr.mxu0 0.0
    %101 = vmatpush1.msra.mxu0 0.0
    %102 = vmatprep.subr.mxu0 0.0
    %103 = vmatpush1.msra.mxu0 0.0
    %104 = vmatprep.subr.mxu0 0.0
    %105 = vmatpush1.msra.mxu0 0.0
    %106 = vmatprep.subr.mxu0 0.0
    %107 = vmatpush1.msra.mxu0 0.0
    %108 = vmatprep.subr.mxu0 0.0
    %109 = vmatpush1.msra.mxu0 0.0
    %110 = vmatprep.subr.mxu0 0.0
    %111 = vmatpush1.msra.mxu0 0.0
    %112 = vmatprep.subr.mxu0 0.0
    %113 = vmatpush1.msra.mxu0 0.0
    %114 = vmatprep.subr.mxu0 0.0
    %115 = vmatpush1.msra.mxu0 0.0
    %116 = vmatprep.subr.mxu0 0.0
    %117 = vmatpush1.msra.mxu0 0.0
    %118 = vmatprep.subr.mxu0 0.0
    %119 = vmatpush1.msra.mxu0 0.0
    %120 = vmatprep.subr.mxu0 0.0
    %121 = vmatpush1.msra.mxu0 0.0
    %122 = vmatprep.subr.mxu0 0.0
    %123 = vmatpush1.msra.mxu0 0.0
    %124 = vmatprep.subr.mxu0 0.0
    %125 = vmatpush1.msra.mxu0 %v67
    %126 = vmatprep.subr.mxu0 0.0
    %127 = vmatpush1.msra.mxu0 %v66
    %128 = vmatprep.subr.mxu0 0.0
    %129 = vmatpush1.msra.mxu0 %v65
    %130 = vmatprep.subr.mxu0 0.0
    %131 = vmatpush1.msra.mxu0 %v64
    %132 = vmatprep.subr.mxu0 0.0
    %133 = vmatpush2.msra.mxu0 0.0
    %134 = vmatprep.subr.mxu0 0.0
    %135 = vmatpush2.msra.mxu0 0.0
    %136 = vmatprep.subr.mxu0 0.0
    %137 = vmatpush2.msra.mxu0 0.0
    %138 = vmatprep.subr.mxu0 0.0
    %139 = vmatpush2.msra.mxu0 0.0
    %140 = vmatprep.subr.mxu0 0.0
    %141 = vmatpush2.msra.mxu0 0.0
    %142 = vmatprep.subr.mxu0 0.0
    %143 = vmatpush2.msra.mxu0 0.0
    %144 = vmatprep.subr.mxu0 0.0
    %145 = vmatpush2.msra.mxu0 0.0
    %146 = vmatprep.subr.mxu0 0.0
    %147 = vmatpush2.msra.mxu0 0.0
    %148 = vmatprep.subr.mxu0 0.0
    %149 = vmatpush2.msra.mxu0 0.0
    %150 = vmatprep.subr.mxu0 0.0
    %151 = vmatpush2.msra.mxu0 0.0
    %152 = vmatprep.subr.mxu0 0.0
    %153 = vmatpush2.msra.mxu0 0.0
    %154 = vmatprep.subr.mxu0 0.0
    %155 = vmatpush2.msra.mxu0 0.0
    %156 = vmatprep.subr.mxu0 0.0
    %157 = vmatpush2.msra.mxu0 0.0
    %158 = vmatprep.subr.mxu0 0.0
    %159 = vmatpush2.msra.mxu0 0.0
    %160 = vmatprep.subr.mxu0 0.0
    %161 = vmatpush2.msra.mxu0 0.0
    %162 = vmatprep.subr.mxu0 0.0
    %163 = vmatpush2.msra.mxu0 0.0
    %164 = vmatprep.mubr.f32.mxu0 0.0
    %165 = vmatmul.mubr.f32.gmra.mxu0 %v77
    %v166 = vpop.f32.mrf.mxu0
    %v167 = vadd.f32 %v73, %v166
    %v168 = vpop.f32.mrf.mxu0
    %169 = vmatprep.mubr.f32.mxu0 0.0
    %170 = vmatmul.mubr.f32.gmra.mxu0 %v80
    %v171 = vpop.f32.mrf.mxu0
    %v172 = vadd.f32 %v73, %v171
    %v173 = vpop.f32.mrf.mxu0
    %174 = vmatprep.mubr.f32.mxu0 0.0
    %175 = vmatmul.mubr.f32.gmra.mxu0 %v83
    %v176 = vpop.f32.mrf.mxu0
    %v177 = vadd.f32 %v73, %v176
    %v178 = vpop.f32.mrf.mxu0
    %179 = vmatprep.mubr.f32.mxu0 0.0
    %180 = vmatmul.mubr.f32.gmra.mxu0 %v86
    %v181 = vpop.f32.mrf.mxu0
    %v182 = vadd.f32 %v73, %v181
    %v183 = vpop.f32.mrf.mxu0
    %184 = vmatprep.mubr.f32.mxu0 0.0
    %185 = vmatmul.mubr.f32.gmra.mxu0 %v89
    %v186 = vpop.f32.mrf.mxu0
    %v187 = vadd.f32 %v73, %v186
    %v188 = vpop.f32.mrf.mxu0
    %189 = vmatprep.mubr.f32.mxu0 0.0
    %190 = vmatmul.mubr.f32.gmra.mxu0 %v92
    %v191 = vpop.f32.mrf.mxu0
    %v192 = vadd.f32 %v73, %v191
    %v193 = vpop.f32.mrf.mxu0
    %194 = vmatprep.mubr.f32.mxu0 0.0
    %195 = vmatmul.mubr.f32.gmra.mxu0 %v95
    %v196 = vpop.f32.mrf.mxu0
    %v197 = vadd.f32 %v73, %v196
    %v198 = vpop.f32.mrf.mxu0
    %199 = vmatprep.mubr.f32.mxu0 0.0
    %200 = vmatmul.mubr.f32.gmra.mxu0 %v98
    %v201 = vpop.f32.mrf.mxu0
    %v202 = vadd.f32 %v73, %v201
    %v203 = vpop.f32.mrf.mxu0
    %204 = vdwg.mxu0
    %v205 = vmax.f32 %v167, 0.0
    %v206 = vmax.f32 %v172, 0.0
    %v207 = vmax.f32 %v177, 0.0
    %v208 = vmax.f32 %v182, 0.0
    %v209 = vmax.f32 %v187, 0.0
    %v210 = vmax.f32 %v192, 0.0
    %v211 = vmax.f32 %v197, 0.0
    %v212 = vmax.f32 %v202, 0.0
    %v213 = vpack.c.bf16 %v206, %v205
    %v214 = vpack.c.bf16 %v208, %v207
    %v215 = vpack.c.bf16 %v210, %v209
    %v216 = vpack.c.bf16 %v212, %v211
    %v217 = vld [vmem:[#allocation2] sm:$0xff]
    %v218 = vld [vmem:[#allocation2 + $0x8] sm:$0xff]
    %v219 = vld [vmem:[#allocation2 + $0x10] sm:$0xff]
    %v220 = vld [vmem:[#allocation2 + $0x18] sm:$0xff]
    %v221 = vld [vmem:[#allocation2 + $0x20] sm:$0xff]
    %v222 = vld [vmem:[#allocation2 + $0x28] sm:$0xff]
    %v223 = vld [vmem:[#allocation2 + $0x30] sm:$0xff]
    %v224 = vld [vmem:[#allocation2 + $0x38] sm:$0xff]
    %v225 = vld [vmem:[#allocation2 + $0x40] sm:$0xff]
    %v226 = vld [vmem:[#allocation2 + $0x48] sm:$0xff]
    %v227 = vld [vmem:[#allocation2 + $0x50] sm:$0xff]
    %v228 = vld [vmem:[#allocation2 + $0x58] sm:$0xff]
    %v229 = vld [vmem:[#allocation2 + $0x60] sm:$0xff]
    %v230 = vld [vmem:[#allocation2 + $0x68] sm:$0xff]
    %v231 = vld [vmem:[#allocation2 + $0x70] sm:$0xff]
    %v232 = vld [vmem:[#allocation2 + $0x78] sm:$0xff]
    %v233 = vld [vmem:[%s4] sm:$0x3]
    %v235 = vlaneseq
    %v236 = vshrl.u32 %v235, 7
    %v237 = vsub.s32 0, %v236
    %v238 = vrot.slane %v233, %v237
    %v239 = vlaneseq
    %v240 = vshrl.u32 %v239, 7
    %v241 = vsub.s32 1, %v240
    %v242 = vrot.slane %v233, %v241
    %v261 = vunpack.c.l.b16 %v217
    %v262 = vunpack.c.h.b16 %v217
    %v263 = vunpack.c.l.b16 %v218
    %v264 = vunpack.c.h.b16 %v218
    %v265 = vunpack.c.l.b16 %v219
    %v266 = vunpack.c.h.b16 %v219
    %v267 = vunpack.c.l.b16 %v220
    %v268 = vunpack.c.h.b16 %v220
    %v269 = vunpack.c.l.b16 %v221
    %v270 = vunpack.c.h.b16 %v221
    %v271 = vunpack.c.l.b16 %v222
    %v272 = vunpack.c.h.b16 %v222
    %v273 = vunpack.c.l.b16 %v223
    %v274 = vunpack.c.h.b16 %v223
    %v275 = vunpack.c.l.b16 %v224
    %v276 = vunpack.c.h.b16 %v224
    %v277 = vunpack.c.l.b16 %v225
    %v278 = vunpack.c.h.b16 %v225
    %v279 = vunpack.c.l.b16 %v226
    %v280 = vunpack.c.h.b16 %v226
    %v281 = vunpack.c.l.b16 %v227
    %v282 = vunpack.c.h.b16 %v227
    %v283 = vunpack.c.l.b16 %v228
    %v284 = vunpack.c.h.b16 %v228
    %v285 = vunpack.c.l.b16 %v229
    %v286 = vunpack.c.h.b16 %v229
    %v287 = vunpack.c.l.b16 %v230
    %v288 = vunpack.c.h.b16 %v230
    %v289 = vunpack.c.l.b16 %v231
    %v290 = vunpack.c.h.b16 %v231
    %v291 = vunpack.c.l.b16 %v232
    %v292 = vunpack.c.h.b16 %v232
    %v293 = vpack.c.b16 %v263, %v261
    %v294 = vpack.c.b16 %v264, %v262
    %v295 = vpack.c.b16 %v267, %v265
    %v296 = vpack.c.b16 %v268, %v266
    %v297 = vpack.c.b16 %v271, %v269
    %v298 = vpack.c.b16 %v272, %v270
    %v299 = vpack.c.b16 %v275, %v273
    %v300 = vpack.c.b16 %v276, %v274
    %v301 = vpack.c.b16 %v279, %v277
    %v302 = vpack.c.b16 %v280, %v278
    %v303 = vpack.c.b16 %v283, %v281
    %v304 = vpack.c.b16 %v284, %v282
    %v305 = vpack.c.b16 %v287, %v285
    %v306 = vpack.c.b16 %v288, %v286
    %v307 = vpack.c.b16 %v291, %v289
    %v308 = vpack.c.b16 %v292, %v290
    %325 = vmatprep.subr.bf16.mxu0 %v308
    %326 = vmatpush1.bf16.msra.mxu0 %v307
    %327 = vmatprep.subr.bf16.mxu0 %v306
    %328 = vmatpush1.bf16.msra.mxu0 %v305
    %329 = vmatprep.subr.bf16.mxu0 %v304
    %330 = vmatpush1.bf16.msra.mxu0 %v303
    %331 = vmatprep.subr.bf16.mxu0 %v302
    %332 = vmatpush1.bf16.msra.mxu0 %v301
    %333 = vmatprep.subr.bf16.mxu0 %v300
    %334 = vmatpush1.bf16.msra.mxu0 %v299
    %335 = vmatprep.subr.bf16.mxu0 %v298
    %336 = vmatpush1.bf16.msra.mxu0 %v297
    %337 = vmatprep.subr.bf16.mxu0 %v296
    %338 = vmatpush1.bf16.msra.mxu0 %v295
    %339 = vmatprep.subr.bf16.mxu0 %v294
    %340 = vmatpush1.bf16.msra.mxu0 %v293
    %341 = vmatprep.subr.bf16.mxu0 0
    %342 = vmatpush2.bf16.msra.mxu0 0
    %343 = vmatprep.subr.bf16.mxu0 0
    %344 = vmatpush2.bf16.msra.mxu0 0
    %345 = vmatprep.subr.bf16.mxu0 0
    %346 = vmatpush2.bf16.msra.mxu0 0
    %347 = vmatprep.subr.bf16.mxu0 0
    %348 = vmatpush2.bf16.msra.mxu0 0
    %349 = vmatprep.subr.bf16.mxu0 0
    %350 = vmatpush2.bf16.msra.mxu0 0
    %351 = vmatprep.subr.bf16.mxu0 0
    %352 = vmatpush2.bf16.msra.mxu0 0
    %353 = vmatprep.subr.bf16.mxu0 0
    %354 = vmatpush2.bf16.msra.mxu0 0
    %355 = vmatprep.subr.bf16.mxu0 0
    %356 = vmatpush2.bf16.msra.mxu0 0
    %357 = vmatprep.mubr.bf16.mxu0 0
    %358 = vmatmul.mubr.bf16.gmra.mxu0 %v213
    %v359 = vpop.f32.mrf.mxu0
    %v360 = vadd.f32 %v238, %v359
    %v361 = vpop.f32.mrf.mxu0
    %v362 = vadd.f32 %v242, %v361
    %v363 = vpop.f32.mrf.mxu0
    %v364 = vadd.f32 %v238, %v363
    %v365 = vpop.f32.mrf.mxu0
    %v366 = vadd.f32 %v242, %v365
    %367 = vmatprep.mubr.bf16.mxu0 0
    %368 = vmatmul.mubr.bf16.gmra.mxu0 %v214
    %v369 = vpop.f32.mrf.mxu0
    %v370 = vadd.f32 %v238, %v369
    %v371 = vpop.f32.mrf.mxu0
    %v372 = vadd.f32 %v242, %v371
    %v373 = vpop.f32.mrf.mxu0
    %v374 = vadd.f32 %v238, %v373
    %v375 = vpop.f32.mrf.mxu0
    %v376 = vadd.f32 %v242, %v375
    %377 = vmatprep.mubr.bf16.mxu0 0
    %378 = vmatmul.mubr.bf16.gmra.mxu0 %v215
    %v379 = vpop.f32.mrf.mxu0
    %v380 = vadd.f32 %v238, %v379
    %v381 = vpop.f32.mrf.mxu0
    %v382 = vadd.f32 %v242, %v381
    %v383 = vpop.f32.mrf.mxu0
    %v384 = vadd.f32 %v238, %v383
    %v385 = vpop.f32.mrf.mxu0
    %v386 = vadd.f32 %v242, %v385
    %387 = vmatprep.mubr.bf16.mxu0 0
    %388 = vmatmul.mubr.bf16.gmra.mxu0 %v216
    %v389 = vpop.f32.mrf.mxu0
    %v390 = vadd.f32 %v238, %v389
    %v391 = vpop.f32.mrf.mxu0
    %v392 = vadd.f32 %v242, %v391
    %v393 = vpop.f32.mrf.mxu0
    %v394 = vadd.f32 %v238, %v393
    %v395 = vpop.f32.mrf.mxu0
    %v396 = vadd.f32 %v242, %v395
    %397 = vdwg.mxu0
    %v398 = vmax.f32 %v360, 0.0
    %v399 = vmax.f32 %v362, 0.0
    %v400 = vmax.f32 %v364, 0.0
    %v401 = vmax.f32 %v366, 0.0
    %v402 = vmax.f32 %v370, 0.0
    %v403 = vmax.f32 %v372, 0.0
    %v404 = vmax.f32 %v374, 0.0
    %v405 = vmax.f32 %v376, 0.0
    %v406 = vmax.f32 %v380, 0.0
    %v407 = vmax.f32 %v382, 0.0
    %v408 = vmax.f32 %v384, 0.0
    %v409 = vmax.f32 %v386, 0.0
    %v410 = vmax.f32 %v390, 0.0
    %v411 = vmax.f32 %v392, 0.0
    %v412 = vmax.f32 %v394, 0.0
    %v413 = vmax.f32 %v396, 0.0
    %v414 = vpack.c.bf16 %v400, %v398
    %v415 = vpack.c.bf16 %v401, %v399
    %v416 = vpack.c.bf16 %v404, %v402
    %v417 = vpack.c.bf16 %v405, %v403
    %v418 = vpack.c.bf16 %v408, %v406
    %v419 = vpack.c.bf16 %v409, %v407
    %v420 = vpack.c.bf16 %v412, %v410
    %v421 = vpack.c.bf16 %v413, %v411
    %v422 = vld [vmem:[#allocation5] sm:$0xf]
    %v423 = vld [vmem:[#allocation5 + $0x4] sm:$0xf]
    %v424 = vld [vmem:[#allocation5 + $0x8] sm:$0xf]
    %v425 = vld [vmem:[#allocation5 + $0xc] sm:$0xf]
    %v426 = vld [vmem:[#allocation5 + $0x10] sm:$0xf]
    %v427 = vld [vmem:[#allocation5 + $0x14] sm:$0xf]
    %v428 = vld [vmem:[#allocation5 + $0x18] sm:$0xf]
    %v429 = vld [vmem:[#allocation5 + $0x1c] sm:$0xf]
    %v430 = vld [vmem:[#allocation5 + $0x20] sm:$0xf]
    %v431 = vld [vmem:[#allocation5 + $0x24] sm:$0xf]
    %v432 = vld [vmem:[#allocation5 + $0x28] sm:$0xf]
    %v433 = vld [vmem:[#allocation5 + $0x2c] sm:$0xf]
    %v434 = vld [vmem:[#allocation5 + $0x30] sm:$0xf]
    %v435 = vld [vmem:[#allocation5 + $0x34] sm:$0xf]
    %v436 = vld [vmem:[#allocation5 + $0x38] sm:$0xf]
    %v437 = vld [vmem:[#allocation5 + $0x3c] sm:$0xf]
    %v438 = vld [vmem:[#allocation5 + $0x40] sm:$0xf]
    %v439 = vld [vmem:[#allocation5 + $0x44] sm:$0xf]
    %v440 = vld [vmem:[#allocation5 + $0x48] sm:$0xf]
    %v441 = vld [vmem:[#allocation5 + $0x4c] sm:$0xf]
    %v442 = vld [vmem:[#allocation5 + $0x50] sm:$0xf]
    %v443 = vld [vmem:[#allocation5 + $0x54] sm:$0xf]
    %v444 = vld [vmem:[#allocation5 + $0x58] sm:$0xf]
    %v445 = vld [vmem:[#allocation5 + $0x5c] sm:$0xf]
    %v446 = vld [vmem:[#allocation5 + $0x60] sm:$0xf]
    %v447 = vld [vmem:[#allocation5 + $0x64] sm:$0xf]
    %v448 = vld [vmem:[#allocation5 + $0x68] sm:$0xf]
    %v449 = vld [vmem:[#allocation5 + $0x6c] sm:$0xf]
    %v450 = vld [vmem:[#allocation5 + $0x70] sm:$0xf]
    %v451 = vld [vmem:[#allocation5 + $0x74] sm:$0xf]
    %v452 = vld [vmem:[#allocation5 + $0x78] sm:$0xf]
    %v453 = vld [vmem:[#allocation5 + $0x7c] sm:$0xf]
    %v454 = vld [vmem:[%s6] sm:$0x1]
    %v456 = vlaneseq
    %v457 = vshrl.u32 %v456, 7
    %v458 = vsub.s32 0, %v457
    %v459 = vrot.slane %v454, %v458
    %v493 = vunpack.c.l.b16 %v422
    %v494 = vunpack.c.l.b16 %v423
    %v495 = vunpack.c.l.b16 %v424
    %v496 = vunpack.c.l.b16 %v425
    %v497 = vunpack.c.l.b16 %v426
    %v498 = vunpack.c.l.b16 %v427
    %v499 = vunpack.c.l.b16 %v428
    %v500 = vunpack.c.l.b16 %v429
    %v501 = vunpack.c.l.b16 %v430
    %v502 = vunpack.c.l.b16 %v431
    %v503 = vunpack.c.l.b16 %v432
    %v504 = vunpack.c.l.b16 %v433
    %v505 = vunpack.c.l.b16 %v434
    %v506 = vunpack.c.l.b16 %v435
    %v507 = vunpack.c.l.b16 %v436
    %v508 = vunpack.c.l.b16 %v437
    %v509 = vunpack.c.l.b16 %v438
    %v510 = vunpack.c.l.b16 %v439
    %v511 = vunpack.c.l.b16 %v440
    %v512 = vunpack.c.l.b16 %v441
    %v513 = vunpack.c.l.b16 %v442
    %v514 = vunpack.c.l.b16 %v443
    %v515 = vunpack.c.l.b16 %v444
    %v516 = vunpack.c.l.b16 %v445
    %v517 = vunpack.c.l.b16 %v446
    %v518 = vunpack.c.l.b16 %v447
    %v519 = vunpack.c.l.b16 %v448
    %v520 = vunpack.c.l.b16 %v449
    %v521 = vunpack.c.l.b16 %v450
    %v522 = vunpack.c.l.b16 %v451
    %v523 = vunpack.c.l.b16 %v452
    %v524 = vunpack.c.l.b16 %v453
    %v525 = vpack.c.b16 %v494, %v493
    %v526 = vpack.c.b16 %v496, %v495
    %v527 = vpack.c.b16 %v498, %v497
    %v528 = vpack.c.b16 %v500, %v499
    %v529 = vpack.c.b16 %v502, %v501
    %v530 = vpack.c.b16 %v504, %v503
    %v531 = vpack.c.b16 %v506, %v505
    %v532 = vpack.c.b16 %v508, %v507
    %v533 = vpack.c.b16 %v510, %v509
    %v534 = vpack.c.b16 %v512, %v511
    %v535 = vpack.c.b16 %v514, %v513
    %v536 = vpack.c.b16 %v516, %v515
    %v537 = vpack.c.b16 %v518, %v517
    %v538 = vpack.c.b16 %v520, %v519
    %v539 = vpack.c.b16 %v522, %v521
    %v540 = vpack.c.b16 %v524, %v523
    %557 = vmatprep.subr.bf16.mxu0 0
    %558 = vmatpush1.bf16.msra.mxu0 %v532
    %559 = vmatprep.subr.bf16.mxu0 0
    %560 = vmatpush1.bf16.msra.mxu0 %v531
    %561 = vmatprep.subr.bf16.mxu0 0
    %562 = vmatpush1.bf16.msra.mxu0 %v530
    %563 = vmatprep.subr.bf16.mxu0 0
    %564 = vmatpush1.bf16.msra.mxu0 %v529
    %565 = vmatprep.subr.bf16.mxu0 0
    %566 = vmatpush1.bf16.msra.mxu0 %v528
    %567 = vmatprep.subr.bf16.mxu0 0
    %568 = vmatpush1.bf16.msra.mxu0 %v527
    %569 = vmatprep.subr.bf16.mxu0 0
    %570 = vmatpush1.bf16.msra.mxu0 %v526
    %571 = vmatprep.subr.bf16.mxu0 0
    %572 = vmatpush1.bf16.msra.mxu0 %v525
    %573 = vmatprep.subr.bf16.mxu0 0
    %574 = vmatpush2.bf16.msra.mxu0 %v540
    %575 = vmatprep.subr.bf16.mxu0 0
    %576 = vmatpush2.bf16.msra.mxu0 %v539
    %577 = vmatprep.subr.bf16.mxu0 0
    %578 = vmatpush2.bf16.msra.mxu0 %v538
    %579 = vmatprep.subr.bf16.mxu0 0
    %580 = vmatpush2.bf16.msra.mxu0 %v537
    %581 = vmatprep.subr.bf16.mxu0 0
    %582 = vmatpush2.bf16.msra.mxu0 %v536
    %583 = vmatprep.subr.bf16.mxu0 0
    %584 = vmatpush2.bf16.msra.mxu0 %v535
    %585 = vmatprep.subr.bf16.mxu0 0
    %586 = vmatpush2.bf16.msra.mxu0 %v534
    %587 = vmatprep.subr.bf16.mxu0 0
    %588 = vmatpush2.bf16.msra.mxu0 %v533
    %589 = vmatprep.mubr.bf16.mxu0 %v415
    %590 = vmatmul.mubr.bf16.gmra.mxu0 %v414
    %v591 = vpop.f32.mrf.mxu0
    %v592 = vadd.f32 %v459, %v591
    %v593 = vpop.f32.mrf.mxu0
    %v594 = vpop.f32.mrf.mxu0
    %v595 = vadd.f32 %v459, %v594
    %v596 = vpop.f32.mrf.mxu0
    %597 = vmatprep.mubr.bf16.mxu0 %v417
    %598 = vmatmul.mubr.bf16.gmra.mxu0 %v416
    %v599 = vpop.f32.mrf.mxu0
    %v600 = vadd.f32 %v459, %v599
    %v601 = vpop.f32.mrf.mxu0
    %v602 = vpop.f32.mrf.mxu0
    %v603 = vadd.f32 %v459, %v602
    %v604 = vpop.f32.mrf.mxu0
    %605 = vmatprep.mubr.bf16.mxu0 %v419
    %606 = vmatmul.mubr.bf16.gmra.mxu0 %v418
    %v607 = vpop.f32.mrf.mxu0
    %v608 = vadd.f32 %v459, %v607
    %v609 = vpop.f32.mrf.mxu0
    %v610 = vpop.f32.mrf.mxu0
    %v611 = vadd.f32 %v459, %v610
    %v612 = vpop.f32.mrf.mxu0
    %613 = vmatprep.mubr.bf16.mxu0 %v421
    %614 = vmatmul.mubr.bf16.gmra.mxu0 %v420
    %v615 = vpop.f32.mrf.mxu0
    %v616 = vadd.f32 %v459, %v615
    %v617 = vpop.f32.mrf.mxu0
    %v618 = vpop.f32.mrf.mxu0
    %v619 = vadd.f32 %v459, %v618
    %v620 = vpop.f32.mrf.mxu0
    %621 = vdwg.mxu0
    %622 = vst [vmem:[#allocation7] sm:$0xff] %v592
    %623 = vst [vmem:[#allocation7 + $0x8] sm:$0xff] %v595
    %624 = vst [vmem:[#allocation7 + $0x10] sm:$0xff] %v600
    %625 = vst [vmem:[#allocation7 + $0x18] sm:$0xff] %v603
    %626 = vst [vmem:[#allocation7 + $0x20] sm:$0xff] %v608
    %627 = vst [vmem:[#allocation7 + $0x28] sm:$0xff] %v611
    %628 = vst [vmem:[#allocation7 + $0x30] sm:$0xff] %v616
    %629 = vst [vmem:[#allocation7 + $0x38] sm:$0xff] %v619
    // Predicated region
    $region38: #{tpu_custom_call.1} parent=1 // pred_check
      _
    $region39: #{tpu_custom_call.1} parent=1 // pred_check_branch
      %631 = sbr.rel (0) target = $region41
    $region40: #{tpu_custom_call.1} parent=1 // pred_region
      %s633 = ssub.s32 1024, 1024
      %634 = vsyncadd [#allocation4], %s633
      %s635 = sshll.u32 [#allocation7], 4
      %s636 = int_to_ptr.vmem [resolvable:$true] %s635
      %641 = dma.vmem_to_hbm [thread:$0]  %s636, 1024, %s7, [#allocation4], 128, 128, 8
    $region41: #{tpu_custom_call.1} parent=1 // pred_fallthru
      _
    // Predicated region
    $region42: #{tpu_custom_call.1} parent=1 // pred_check
      _
    $region43: #{tpu_custom_call.1} parent=1 // pred_check_branch
      %643 = sbr.rel (0) target = $region45
    $region44: #{tpu_custom_call.1} parent=1 // pred_region
      %644 = dma.done [#allocation4], 1024
    $region45: #{tpu_custom_call.1} parent=1 // pred_fallthru
      _
    %645 = vsyncpa [#allocation3], 1
    %646 = vsyncpa [#allocation6], 1
    %647 = vsyncpa [#allocation4], 1

</llo_original>
